<compile_context>
chip_gen: v5e
topology: v5e:2x2
jax: 0.10.0
libtpu: 0.0.40
codegen_flags: <defaults>
</compile_context>

<pallas_src>
import jax
import jax.numpy as jnp
from jax import lax
from jax.experimental import pallas as pl
from jax.experimental.pallas import tpu as pltpu


def _vmem_limit_bytes(HW, C, CQP, TQ, cd_bytes):
    """Explicit scoped-VMEM budget (default 16/32 MiB is too small for real HW)."""
    est = (
        2 * HW * C * 4                       # resident x block (double-buffered)
        + 2 * TQ * C * 4                     # output tile (double-buffered)
        + 2 * (2 * C * CQP + C * C) * cd_bytes  # Wq/Wk/Wv blocks
        + 2 * (2 * CQP + C) * 4              # biases
        + HW * (CQP + C) * cd_bytes          # K / V scratch
        + 4 * TQ * HW * 4                    # scores / exp temporaries (headroom)
        + TQ * CQP * 4 + 2 * TQ * C * 4      # q tile + out temporaries
    )
    est = int(est * 1.25)
    try:
        cap = int(pltpu.get_tpu_info().vmem_capacity_bytes * 0.9)
    except Exception:
        cap = 64 << 20                       # conservative (v7x per-TC VMEM)
    return int(min(max(est, 32 << 20), cap))


def self_attention_pallas(x_nchw, wq, bq, wk, bk, wv, bv, scale,
                          *, tq=128, compute_dtype=jnp.bfloat16):
    """x_nchw: (B, C, H, W) f32. wq/wk: (Cq, C), wv: (C, C), biases 1-D.

    compute_dtype: dtype of MXU matmul operands (softmax + accumulation stay f32).
    """
    B, C, H, W = x_nchw.shape
    Cq = wq.shape[0]
    HW = H * W

    TQ = min(tq, HW)
    assert HW % TQ == 0 and TQ % 8 == 0, "TQ must divide HW and be a multiple of 8"
    num_q = HW // TQ

    CQP = ((Cq + 127) // 128) * 128          # lane-pad query/key channels to 128

    # ---- wrapper-side weight prep: transpose, fold scale into Wq, zero-pad Cq ----
    wq_p = jnp.zeros((C, CQP), jnp.float32).at[:, :Cq].set((wq * scale).T.astype(jnp.float32))
    bq_p = jnp.zeros((1, CQP), jnp.float32).at[:, :Cq].set((bq * scale)[None, :].astype(jnp.float32))
    wk_p = jnp.zeros((C, CQP), jnp.float32).at[:, :Cq].set(wk.T.astype(jnp.float32))
    bk_p = jnp.zeros((1, CQP), jnp.float32).at[:, :Cq].set(bk[None, :].astype(jnp.float32))
    wv_p = wv.T.astype(jnp.float32)                                  # (C, C)
    bv_p = bv[None, :].astype(jnp.float32)                           # (1, C)

    wq_p = wq_p.astype(compute_dtype)
    wk_p = wk_p.astype(compute_dtype)
    wv_p = wv_p.astype(compute_dtype)

    # NCHW -> (B, HW, C): pixels on sublanes, channels on lanes.
    x_bpc = jnp.transpose(x_nchw.reshape(B, C, HW), (0, 2, 1)).astype(jnp.float32)

    exact_recip = (jnp.dtype(compute_dtype) == jnp.dtype(jnp.float32))

    def kernel(x_ref, wq_ref, bq_ref, wk_ref, bk_ref, wv_ref, bv_ref, o_ref,
               k_scr, v_scr):
        # x_ref: (HW, C) f32 (batch dim squeezed), resident for the whole batch elem.
        qi = pl.program_id(1)

        # Once per batch element: K / V projections, written directly into their
        # scratch buffers (no fused (HW, CATW) intermediate), reused by every Q tile.
        @pl.when(qi == 0)
        def _():
            xc = x_ref[...].astype(compute_dtype)                               # (HW, C)
            k_scr[...] = (jnp.dot(xc, wk_ref[...],
                                  preferred_element_type=jnp.float32)
                          + bk_ref[...]).astype(compute_dtype)                  # (HW, CQP)
            v_scr[...] = (jnp.dot(xc, wv_ref[...],
                                  preferred_element_type=jnp.float32)
                          + bv_ref[...]).astype(compute_dtype)                  # (HW, C)

        row0 = pl.multiple_of(qi * TQ, TQ)
        x_tile = x_ref[pl.ds(row0, TQ), :]                                      # (TQ, C) f32

        # Per-tile Q projection (scale already folded into wq_ref columns).
        q = (jnp.dot(x_tile.astype(compute_dtype), wq_ref[...],
                     preferred_element_type=jnp.float32)
             + bq_ref[...]).astype(compute_dtype)                               # (TQ, CQP)

        # scores[i, j] = q_i . k_j  -- contract last dims of both; no k transpose.
        scores = lax.dot_general(q, k_scr[...], (((1,), (1,)), ((), ())),
                                 preferred_element_type=jnp.float32)            # (TQ, HW) f32

        # softmax over j, f32; normalization deferred until after the V matmul.
        scores = scores - jnp.max(scores, axis=-1, keepdims=True)
        p = jnp.exp(scores)
        denom = jnp.sum(p, axis=-1, keepdims=True)                              # (TQ, 1) f32
        out = jnp.dot(p.astype(compute_dtype), v_scr[...],
                      preferred_element_type=jnp.float32)                       # (TQ, C) f32
        if exact_recip:
            inv_denom = 1.0 / denom
        else:
            inv_denom = pl.reciprocal(denom, approx=True)

        o_ref[...] = (out * inv_denom + x_tile).astype(o_ref.dtype)             # residual

    cd_bytes = jnp.dtype(compute_dtype).itemsize
    out_bpc = pl.pallas_call(
        kernel,
        out_shape=jax.ShapeDtypeStruct((B, HW, C), jnp.float32),
        grid_spec=pltpu.PrefetchScalarGridSpec(
            num_scalar_prefetch=0,
            grid=(B, num_q),
            in_specs=[
                # Full x for this batch element (constant block index across qi ->
                # DMA'd once per batch element, kept resident).
                pl.BlockSpec((pl.Squeezed(), HW, C), lambda b, qi: (b, 0, 0)),
                # Weights / biases: single resident blocks.
                pl.BlockSpec((C, CQP), lambda b, qi: (0, 0)),
                pl.BlockSpec((1, CQP), lambda b, qi: (0, 0)),
                pl.BlockSpec((C, CQP), lambda b, qi: (0, 0)),
                pl.BlockSpec((1, CQP), lambda b, qi: (0, 0)),
                pl.BlockSpec((C, C), lambda b, qi: (0, 0)),
                pl.BlockSpec((1, C), lambda b, qi: (0, 0)),
            ],
            out_specs=pl.BlockSpec((pl.Squeezed(), TQ, C), lambda b, qi: (b, qi, 0)),
            scratch_shapes=[
                pltpu.VMEM((HW, CQP), compute_dtype),   # K (all of HW)
                pltpu.VMEM((HW, C), compute_dtype),     # V (all of HW)
            ],
        ),
        # Q-tile axis must be "arbitrary": K/V scratch is carried across it.
        compiler_params=pltpu.CompilerParams(
            dimension_semantics=("parallel", "arbitrary"),
            vmem_limit_bytes=_vmem_limit_bytes(HW, C, CQP, TQ, cd_bytes)),
    )(x_bpc, wq_p, bq_p, wk_p, bk_p, wv_p, bv_p)

    # (B, HW, C) -> NCHW
    return jnp.transpose(out_bpc, (0, 2, 1)).reshape(B, C, H, W)


def self_attention_ref(x_nchw, wq, bq, wk, bk, wv, bv, scale):
    """Pure-JAX f32 reference mirroring the PyTorch forward."""
    B, C, H, W = x_nchw.shape
    HW = H * W
    xf = x_nchw.reshape(B, C, HW)                                  # (B, C, HW)
    q = jnp.einsum('oc,bcp->bop', wq, xf) + bq[None, :, None]      # (B, Cq, HW)
    k = jnp.einsum('oc,bcp->bop', wk, xf) + bk[None, :, None]      # (B, Cq, HW)
    v = jnp.einsum('oc,bcp->bop', wv, xf) + bv[None, :, None]      # (B, C, HW)
    attn = jnp.einsum('bci,bcj->bij', q, k) * scale                # (B, HW, HW)
    attn = jax.nn.softmax(attn, axis=-1)
    out = jnp.einsum('bcj,bij->bci', v, attn)                      # (B, C, HW)
    return out.reshape(B, C, H, W) + x_nchw


if __name__ == "__main__":
    B, C, H, W = 2, 32, 8, 8        # in_channels=32 -> query/key channels = 4
    Cq = C // 8
    scale = Cq ** (-0.5)

    key = jax.random.PRNGKey(0)
    kx, kwq, kbq, kwk, kbk, kwv, kbv = jax.random.split(key, 7)

    x = jax.random.normal(kx, (B, C, H, W), dtype=jnp.float32)
    wq = jax.random.normal(kwq, (Cq, C), dtype=jnp.float32) * 0.1
    bq = jax.random.normal(kbq, (Cq,), dtype=jnp.float32) * 0.1
    wk = jax.random.normal(kwk, (Cq, C), dtype=jnp.float32) * 0.1
    bk = jax.random.normal(kbk, (Cq,), dtype=jnp.float32) * 0.1
    wv = jax.random.normal(kwv, (C, C), dtype=jnp.float32) * 0.1
    bv = jax.random.normal(kbv, (C,), dtype=jnp.float32) * 0.1

    ref = self_attention_ref(x, wq, bq, wk, bk, wv, bv, scale)

    # tq=32 -> 2 Q tiles per batch element, exercising the flash-style tiling.
    # 1) f32 compute path (exact reciprocal): tight algorithmic check.
    out_f32 = self_attention_pallas(x, wq, bq, wk, bk, wv, bv, scale,
                                    tq=32, compute_dtype=jnp.float32)
    out_f32 = jax.block_until_ready(out_f32)
    assert out_f32.shape == (B, C, H, W)
    assert jnp.allclose(out_f32, ref, atol=2e-3, rtol=2e-3), "f32 mismatch vs reference"

    # 2) bf16 MXU operands (f32 accumulation + f32 softmax): production path.
    out_bf16 = self_attention_pallas(x, wq, bq, wk, bk, wv, bv, scale,
                                     tq=32, compute_dtype=jnp.bfloat16)
    out_bf16 = jax.block_until_ready(out_bf16)
    assert out_bf16.shape == (B, C, H, W)
    assert jnp.allclose(out_bf16, ref, atol=3e-2, rtol=3e-2), "bf16 mismatch vs reference"

    print("KERNEL_OK")
</pallas_src>

<mosaic_0001>
module attributes {stable_mosaic.version = 11 : i64} {
  func.func @kernel(%arg0: i32, %arg1: i32, %arg2: memref<1x64x32xf32, #tpu.memory_space<vmem>>, %arg3: memref<32x128xf32, #tpu.memory_space<vmem>>, %arg4: memref<1x128xf32, #tpu.memory_space<vmem>>, %arg5: memref<32x128xf32, #tpu.memory_space<vmem>>, %arg6: memref<1x128xf32, #tpu.memory_space<vmem>>, %arg7: memref<32x32xf32, #tpu.memory_space<vmem>>, %arg8: memref<1x32xf32, #tpu.memory_space<vmem>>, %arg9: memref<1x32x32xf32, #tpu.memory_space<vmem>>, %arg10: memref<64x128xf32, #tpu.memory_space<vmem>>, %arg11: memref<64x32xf32, #tpu.memory_space<vmem>>) attributes {dimension_semantics = [#tpu.dimension_semantics<parallel>, #tpu.dimension_semantics<arbitrary>], iteration_bounds = array<i64: 2, 2>, scalar_prefetch = 0 : i64, scratch_operands = 2 : i64, tpu.core_type = #tpu.core_type<tc>, window_params = [{transform_indices = @transform_0, window_bounds = array<i64: 1, 64, 32>}, {pipeline_mode = #tpu.pipeline_mode<synchronous>, transform_indices = @transform_1, window_bounds = array<i64: 32, 128>}, {pipeline_mode = #tpu.pipeline_mode<synchronous>, transform_indices = @transform_2, window_bounds = array<i64: 1, 128>}, {pipeline_mode = #tpu.pipeline_mode<synchronous>, transform_indices = @transform_3, window_bounds = array<i64: 32, 128>}, {pipeline_mode = #tpu.pipeline_mode<synchronous>, transform_indices = @transform_4, window_bounds = array<i64: 1, 128>}, {pipeline_mode = #tpu.pipeline_mode<synchronous>, transform_indices = @transform_5, window_bounds = array<i64: 32, 32>}, {pipeline_mode = #tpu.pipeline_mode<synchronous>, transform_indices = @transform_6, window_bounds = array<i64: 1, 32>}, {transform_indices = @transform_7, window_bounds = array<i64: 1, 32, 32>}]} {
    %c0_i32 = arith.constant 0 : i32
    %0 = arith.cmpi eq, %arg1, %c0_i32 : i32
    %1 = arith.extui %0 : i1 to i32
    %c0_i32_0 = arith.constant 0 : i32
    %2 = arith.cmpi ne, %1, %c0_i32_0 : i32
    scf.if %2 {
      %c0_18 = arith.constant 0 : index
      %c0_19 = arith.constant 0 : index
      %c0_20 = arith.constant 0 : index
      %32 = vector.load %arg2[%c0_18, %c0_19, %c0_20] : memref<1x64x32xf32, #tpu.memory_space<vmem>>, vector<1x64x32xf32>
      %33 = vector.shape_cast %32 : vector<1x64x32xf32> to vector<64x32xf32>
      %c0_21 = arith.constant 0 : index
      %c0_22 = arith.constant 0 : index
      %34 = vector.load %arg5[%c0_21, %c0_22] : memref<32x128xf32, #tpu.memory_space<vmem>>, vector<32x128xf32>
      %cst_23 = arith.constant dense<0.000000e+00> : vector<64x128xf32>
      %35 = tpu.matmul %33, %34, %cst_23 {dimension_numbers = #tpu.dot_dimension_numbers<[1], [0], [0], [1], [0, 0, 1, 1], [], []>} : vector<64x32xf32>, vector<32x128xf32>, vector<64x128xf32> -> vector<64x128xf32>
      %c0_24 = arith.constant 0 : index
      %c0_25 = arith.constant 0 : index
      %36 = vector.load %arg6[%c0_24, %c0_25] : memref<1x128xf32, #tpu.memory_space<vmem>>, vector<1x128xf32>
      %37 = vector.broadcast %36 : vector<1x128xf32> to vector<64x128xf32>
      %38 = arith.addf %35, %37 : vector<64x128xf32>
      %c0_26 = arith.constant 0 : index
      %c0_27 = arith.constant 0 : index
      %39 = vector.load %arg10[%c0_26, %c0_27] : memref<64x128xf32, #tpu.memory_space<vmem>>, vector<64x128xf32>
      tpu.vector_store %arg10[%c0_26, %c0_27], %38 {strides = array<i32>} : memref<64x128xf32, #tpu.memory_space<vmem>>, vector<64x128xf32>,
      %c0_28 = arith.constant 0 : index
      %c0_29 = arith.constant 0 : index
      %40 = vector.load %arg7[%c0_28, %c0_29] : memref<32x32xf32, #tpu.memory_space<vmem>>, vector<32x32xf32>
      %cst_30 = arith.constant dense<0.000000e+00> : vector<64x32xf32>
      %41 = tpu.matmul %33, %40, %cst_30 {dimension_numbers = #tpu.dot_dimension_numbers<[1], [0], [0], [1], [0, 0, 1, 1], [], []>} : vector<64x32xf32>, vector<32x32xf32>, vector<64x32xf32> -> vector<64x32xf32>
      %c0_31 = arith.constant 0 : index
      %c0_32 = arith.constant 0 : index
      %42 = vector.load %arg8[%c0_31, %c0_32] : memref<1x32xf32, #tpu.memory_space<vmem>>, vector<1x32xf32>
      %43 = vector.broadcast %42 : vector<1x32xf32> to vector<64x32xf32>
      %44 = arith.addf %41, %43 : vector<64x32xf32>
      %c0_33 = arith.constant 0 : index
      %c0_34 = arith.constant 0 : index
      %45 = vector.load %arg11[%c0_33, %c0_34] : memref<64x32xf32, #tpu.memory_space<vmem>>, vector<64x32xf32>
      tpu.vector_store %arg11[%c0_33, %c0_34], %44 {strides = array<i32>} : memref<64x32xf32, #tpu.memory_space<vmem>>, vector<64x32xf32>,
    } else {
    }
    %c32_i32 = arith.constant 32 : i32
    %3 = arith.muli %arg1, %c32_i32 : i32
    %4 = tpu.assume_multiple %3, 32 : i32
    %c0 = arith.constant 0 : index
    %5 = arith.index_cast %4 : i32 to index
    %c0_1 = arith.constant 0 : index
    %6 = vector.load %arg2[%c0, %5, %c0_1] : memref<1x64x32xf32, #tpu.memory_space<vmem>>, vector<1x32x32xf32>
    %7 = vector.shape_cast %6 : vector<1x32x32xf32> to vector<32x32xf32>
    %c0_2 = arith.constant 0 : index
    %c0_3 = arith.constant 0 : index
    %8 = vector.load %arg3[%c0_2, %c0_3] : memref<32x128xf32, #tpu.memory_space<vmem>>, vector<32x128xf32>
    %cst = arith.constant dense<0.000000e+00> : vector<32x128xf32>
    %9 = tpu.matmul %7, %8, %cst {dimension_numbers = #tpu.dot_dimension_numbers<[1], [0], [0], [1], [0, 0, 1, 1], [], []>} : vector<32x32xf32>, vector<32x128xf32>, vector<32x128xf32> -> vector<32x128xf32>
    %c0_4 = arith.constant 0 : index
    %c0_5 = arith.constant 0 : index
    %10 = vector.load %arg4[%c0_4, %c0_5] : memref<1x128xf32, #tpu.memory_space<vmem>>, vector<1x128xf32>
    %11 = vector.broadcast %10 : vector<1x128xf32> to vector<32x128xf32>
    %12 = arith.addf %9, %11 : vector<32x128xf32>
    %c0_6 = arith.constant 0 : index
    %c0_7 = arith.constant 0 : index
    %13 = vector.load %arg10[%c0_6, %c0_7] : memref<64x128xf32, #tpu.memory_space<vmem>>, vector<64x128xf32>
    %cst_8 = arith.constant dense<0.000000e+00> : vector<32x64xf32>
    %14 = tpu.matmul %12, %13, %cst_8 {dimension_numbers = #tpu.dot_dimension_numbers<[1], [1], [0], [0], [0, 0, 1, 0], [], []>} : vector<32x128xf32>, vector<64x128xf32>, vector<32x64xf32> -> vector<32x64xf32>
    %cst_9 = arith.constant dense<0xFF800000> : vector<32xf32>
    %15 = vector.multi_reduction <maximumf>, %14, %cst_9 [1] : vector<32x64xf32> to vector<32xf32>
    %16 = vector.shape_cast %15 : vector<32xf32> to vector<32x1xf32>
    %17 = vector.broadcast %16 : vector<32x1xf32> to vector<32x64xf32>
    %18 = arith.subf %14, %17 : vector<32x64xf32>
    %19 = math.exp %18 : vector<32x64xf32>
    %cst_10 = arith.constant dense<0.000000e+00> : vector<32xf32>
    %20 = vector.multi_reduction <add>, %19, %cst_10 [1] : vector<32x64xf32> to vector<32xf32>
    %21 = vector.shape_cast %20 : vector<32xf32> to vector<32x1xf32>
    %c0_11 = arith.constant 0 : index
    %c0_12 = arith.constant 0 : index
    %22 = vector.load %arg11[%c0_11, %c0_12] : memref<64x32xf32, #tpu.memory_space<vmem>>, vector<64x32xf32>
    %cst_13 = arith.constant dense<0.000000e+00> : vector<32x32xf32>
    %23 = tpu.matmul %19, %22, %cst_13 {dimension_numbers = #tpu.dot_dimension_numbers<[1], [0], [0], [1], [0, 0, 1, 1], [], []>} : vector<32x64xf32>, vector<64x32xf32>, vector<32x32xf32> -> vector<32x32xf32>
    %cst_14 = arith.constant 1.000000e+00 : f32
    %24 = vector.broadcast %cst_14 : f32 to vector<32x1xf32>
    %25 = arith.divf %24, %21 : vector<32x1xf32>
    %26 = vector.broadcast %25 : vector<32x1xf32> to vector<32x32xf32>
    %27 = arith.mulf %23, %26 : vector<32x32xf32>
    %28 = arith.addf %27, %7 : vector<32x32xf32>
    %c0_15 = arith.constant 0 : index
    %c0_16 = arith.constant 0 : index
    %c0_17 = arith.constant 0 : index
    %29 = vector.load %arg9[%c0_15, %c0_16, %c0_17] : memref<1x32x32xf32, #tpu.memory_space<vmem>>, vector<1x32x32xf32>
    %30 = vector.shape_cast %29 : vector<1x32x32xf32> to vector<32x32xf32>
    %31 = vector.shape_cast %28 : vector<32x32xf32> to vector<1x32x32xf32>
    tpu.vector_store %arg9[%c0_15, %c0_16, %c0_17], %31 {strides = array<i32>} : memref<1x32x32xf32, #tpu.memory_space<vmem>>, vector<1x32x32xf32>,
    return
  }
  func.func @transform_0(%arg0: i32, %arg1: i32) -> (i32, i32, i32) {
    %c0_i32 = arith.constant 0 : i32
    %c0_i32_0 = arith.constant 0 : i32
    %c0_i32_1 = arith.constant 0 : i32
    return %arg0, %c0_i32, %c0_i32_0 : i32, i32, i32
  }
  func.func @transform_1(%arg0: i32, %arg1: i32) -> (i32, i32) {
    %c0_i32 = arith.constant 0 : i32
    %c0_i32_0 = arith.constant 0 : i32
    %c0_i32_1 = arith.constant 0 : i32
    return %c0_i32, %c0_i32_0 : i32, i32
  }
  func.func @transform_2(%arg0: i32, %arg1: i32) -> (i32, i32) {
    %c0_i32 = arith.constant 0 : i32
    %c0_i32_0 = arith.constant 0 : i32
    %c0_i32_1 = arith.constant 0 : i32
    return %c0_i32, %c0_i32_0 : i32, i32
  }
  func.func @transform_3(%arg0: i32, %arg1: i32) -> (i32, i32) {
    %c0_i32 = arith.constant 0 : i32
    %c0_i32_0 = arith.constant 0 : i32
    %c0_i32_1 = arith.constant 0 : i32
    return %c0_i32, %c0_i32_0 : i32, i32
  }
  func.func @transform_4(%arg0: i32, %arg1: i32) -> (i32, i32) {
    %c0_i32 = arith.constant 0 : i32
    %c0_i32_0 = arith.constant 0 : i32
    %c0_i32_1 = arith.constant 0 : i32
    return %c0_i32, %c0_i32_0 : i32, i32
  }
  func.func @transform_5(%arg0: i32, %arg1: i32) -> (i32, i32) {
    %c0_i32 = arith.constant 0 : i32
    %c0_i32_0 = arith.constant 0 : i32
    %c0_i32_1 = arith.constant 0 : i32
    return %c0_i32, %c0_i32_0 : i32, i32
  }
  func.func @transform_6(%arg0: i32, %arg1: i32) -> (i32, i32) {
    %c0_i32 = arith.constant 0 : i32
    %c0_i32_0 = arith.constant 0 : i32
    %c0_i32_1 = arith.constant 0 : i32
    return %c0_i32, %c0_i32_0 : i32, i32
  }
  func.func @transform_7(%arg0: i32, %arg1: i32) -> (i32, i32, i32) {
    %c0_i32 = arith.constant 0 : i32
    %c0_i32_0 = arith.constant 0 : i32
    return %arg0, %arg1, %c0_i32 : i32, i32, i32
  }
}

</mosaic_0001>

<llo_original>
// kernel: tpu_custom_call.1
$region0: #{tpu_custom_call.1}
  #allocation0 [shape = 'u32[]', space=smem, size = 0x4, offset = 0x4, fixed_abs, tag = 'smem constant byte address 0x4 - core index']
  #allocation1 [shape = 'u32[72,128]{1,0:T(1,128)}', space=vmem, size = 0x9000, scoped, tag = 'internal scratch']
  #allocation2 [shape = 'f32[64,128]{1,0:T(8,128)}', space=vmem, size = 0x8000, scoped, tag = 'scratch operand']
  #allocation3 [shape = 'f32[64,32]{1,0:T(8,128)}', space=vmem, size = 0x8000, scoped, tag = 'scratch operand']
  %s0 = inlined_call_operand.vmem [shape: f32[2,64,32], index: 0, kind: input, shape index: {}]
  %s1 = inlined_call_operand.vmem [shape: f32[32,128], index: 1, kind: input, shape index: {}]
  %s2 = inlined_call_operand.vmem [shape: f32[1,128], index: 2, kind: input, shape index: {}]
  %s3 = inlined_call_operand.vmem [shape: f32[32,128], index: 3, kind: input, shape index: {}]
  %s4 = inlined_call_operand.vmem [shape: f32[1,128], index: 4, kind: input, shape index: {}]
  %s5 = inlined_call_operand.vmem [shape: f32[32,32], index: 5, kind: input, shape index: {}]
  %s6 = inlined_call_operand.vmem [shape: f32[1,32], index: 6, kind: input, shape index: {}]
  %s7 = inlined_call_operand.vmem [shape: f32[2,64,32], index: 7, kind: output, shape index: {}]
  %s8 = sld [smem:[#allocation0]]
  $region65: #{tpu_custom_call.1} parent=0
    _
  %s10 = ssub.s32 1, %s8
  %s11 = scalar_select 0, %s10, %s8
  loop: start=0, step=1, limit=6
  $region2: #{tpu_custom_call.1} parent=0 // loop_pre_header
    _
  $region3: #{tpu_custom_call.1} parent=0 // loop_header
    %s13 = sphi 0, %s17
    %p14 = scmp.ge.s32.totalorder %s13, 6
    %s20 = sphi 0, %s32
    %s21 = sphi 0, %s28
    %s22 = sphi 0, %s20
    %s23 = sphi 0, %s21
    %s24 = sphi 0, %s22
    %s25 = sphi 0, %s23
    %s35 = sphi 0, %s37
    %s38 = sphi 0, %s35
    %s39 = sphi 0, %s38
    %s55 = sphi 0, %s39
    %s59 = sphi 0, %s59
    %s61 = sphi 0, %s59
    %s62 = sphi 0, %s61
    %s76 = sphi 0, %s62
    %s80 = sphi 0, %s80
    %s82 = sphi 0, %s80
    %s83 = sphi 0, %s82
    %s97 = sphi 0, %s83
    %s101 = sphi 0, %s101
    %s103 = sphi 0, %s101
    %s104 = sphi 0, %s103
    %s118 = sphi 0, %s104
    %s122 = sphi 0, %s122
    %s124 = sphi 0, %s122
    %s125 = sphi 0, %s124
    %s139 = sphi 0, %s125
    %s143 = sphi 0, %s143
    %s145 = sphi 0, %s143
    %s146 = sphi 0, %s145
    %s160 = sphi 0, %s146
    %s164 = sphi 0, %s164
    %s166 = sphi 0, %s164
    %s167 = sphi 0, %s166
    %s181 = sphi 0, %s167
    %s189 = sphi 0, %s191
    %s192 = sphi 0, %s189
    %s193 = sphi 0, %s192
    %s209 = sphi 0, %s193
  $region4: #{tpu_custom_call.1} parent=0 // loop_header_branch
    %16 = sbr.rel (%p14) target = $region8
  $region5: #{tpu_custom_call.1} parent=0 // loop_body
    %s18 = ssub.s32 %s13, 1
    %s19 = ssub.s32 %s13, 2
    %s26 = sadd.s32 1, %s21
    %p27 = scmp.ge.s32.totalorder %s26, 2
    %s28 = scalar_select %p27, 0, %s26
    %s29 = sadd.s32 1, %s20
    %s30 = scalar_select %p27, %s29, %s20
    %p31 = scmp.ge.s32.totalorder %s30, 2
    %s32 = scalar_select %p31, 0, %s30
    %s33 = ssub.s32 %s20, %s32
    %p34 = scmp.eq.s32.totalorder %s33, 0
    %s36 = sadd.s32 %s35, 1
    %s37 = scalar_select %p34, %s35, %s36
    %p40 = pneg %p34
    %p41 = scmp.eq.s32.totalorder %s13, 3
    %p42 = por %p40, %p41
    %p43 = scmp.ne.s32.totalorder %s35, %s38
    %p44 = scmp.eq.s32.totalorder %s13, 0
    %p45 = por %p43, %p44
    %p46 = scmp.ne.s32.totalorder %s35, %s38
    %p47 = scmp.eq.s32.totalorder %s18, 3
    %p48 = por %p46, %p47
    %p49 = scmp.ne.s32.totalorder %s38, %s39
    %p50 = scmp.eq.s32.totalorder %s18, 0
    %p51 = por %p49, %p50
    %p52 = scmp.ne.s32.totalorder %s38, %s39
    %p53 = scmp.eq.s32.totalorder %s19, 3
    %p54 = por %p52, %p53
    %p56 = scmp.ne.s32.totalorder %s39, %s55
    %p57 = scmp.eq.s32.totalorder %s19, 0
    %p58 = por %p56, %p57
    %s60 = sadd.s32 %s59, 1
    %p63 = scmp.eq.s32.totalorder %s13, 3
    %p64 = scmp.ne.s32.totalorder %s59, %s61
    %p65 = scmp.eq.s32.totalorder %s13, 0
    %p66 = por %p64, %p65
    %p67 = scmp.ne.s32.totalorder %s59, %s61
    %p68 = scmp.eq.s32.totalorder %s18, 3
    %p69 = por %p67, %p68
    %p70 = scmp.ne.s32.totalorder %s61, %s62
    %p71 = scmp.eq.s32.totalorder %s18, 0
    %p72 = por %p70, %p71
    %p73 = scmp.ne.s32.totalorder %s61, %s62
    %p74 = scmp.eq.s32.totalorder %s19, 3
    %p75 = por %p73, %p74
    %p77 = scmp.ne.s32.totalorder %s62, %s76
    %p78 = scmp.eq.s32.totalorder %s19, 0
    %p79 = por %p77, %p78
    %s81 = sadd.s32 %s80, 1
    %p84 = scmp.eq.s32.totalorder %s13, 3
    %p85 = scmp.ne.s32.totalorder %s80, %s82
    %p86 = scmp.eq.s32.totalorder %s13, 0
    %p87 = por %p85, %p86
    %p88 = scmp.ne.s32.totalorder %s80, %s82
    %p89 = scmp.eq.s32.totalorder %s18, 3
    %p90 = por %p88, %p89
    %p91 = scmp.ne.s32.totalorder %s82, %s83
    %p92 = scmp.eq.s32.totalorder %s18, 0
    %p93 = por %p91, %p92
    %p94 = scmp.ne.s32.totalorder %s82, %s83
    %p95 = scmp.eq.s32.totalorder %s19, 3
    %p96 = por %p94, %p95
    %p98 = scmp.ne.s32.totalorder %s83, %s97
    %p99 = scmp.eq.s32.totalorder %s19, 0
    %p100 = por %p98, %p99
    %s102 = sadd.s32 %s101, 1
    %p105 = scmp.eq.s32.totalorder %s13, 3
    %p106 = scmp.ne.s32.totalorder %s101, %s103
    %p107 = scmp.eq.s32.totalorder %s13, 0
    %p108 = por %p106, %p107
    %p109 = scmp.ne.s32.totalorder %s101, %s103
    %p110 = scmp.eq.s32.totalorder %s18, 3
    %p111 = por %p109, %p110
    %p112 = scmp.ne.s32.totalorder %s103, %s104
    %p113 = scmp.eq.s32.totalorder %s18, 0
    %p114 = por %p112, %p113
    %p115 = scmp.ne.s32.totalorder %s103, %s104
    %p116 = scmp.eq.s32.totalorder %s19, 3
    %p117 = por %p115, %p116
    %p119 = scmp.ne.s32.totalorder %s104, %s118
    %p120 = scmp.eq.s32.totalorder %s19, 0
    %p121 = por %p119, %p120
    %s123 = sadd.s32 %s122, 1
    %p126 = scmp.eq.s32.totalorder %s13, 3
    %p127 = scmp.ne.s32.totalorder %s122, %s124
    %p128 = scmp.eq.s32.totalorder %s13, 0
    %p129 = por %p127, %p128
    %p130 = scmp.ne.s32.totalorder %s122, %s124
    %p131 = scmp.eq.s32.totalorder %s18, 3
    %p132 = por %p130, %p131
    %p133 = scmp.ne.s32.totalorder %s124, %s125
    %p134 = scmp.eq.s32.totalorder %s18, 0
    %p135 = por %p133, %p134
    %p136 = scmp.ne.s32.totalorder %s124, %s125
    %p137 = scmp.eq.s32.totalorder %s19, 3
    %p138 = por %p136, %p137
    %p140 = scmp.ne.s32.totalorder %s125, %s139
    %p141 = scmp.eq.s32.totalorder %s19, 0
    %p142 = por %p140, %p141
    %s144 = sadd.s32 %s143, 1
    %p147 = scmp.eq.s32.totalorder %s13, 3
    %p148 = scmp.ne.s32.totalorder %s143, %s145
    %p149 = scmp.eq.s32.totalorder %s13, 0
    %p150 = por %p148, %p149
    %p151 = scmp.ne.s32.totalorder %s143, %s145
    %p152 = scmp.eq.s32.totalorder %s18, 3
    %p153 = por %p151, %p152
    %p154 = scmp.ne.s32.totalorder %s145, %s146
    %p155 = scmp.eq.s32.totalorder %s18, 0
    %p156 = por %p154, %p155
    %p157 = scmp.ne.s32.totalorder %s145, %s146
    %p158 = scmp.eq.s32.totalorder %s19, 3
    %p159 = por %p157, %p158
    %p161 = scmp.ne.s32.totalorder %s146, %s160
    %p162 = scmp.eq.s32.totalorder %s19, 0
    %p163 = por %p161, %p162
    %s165 = sadd.s32 %s164, 1
    %p168 = scmp.eq.s32.totalorder %s13, 3
    %p169 = scmp.ne.s32.totalorder %s164, %s166
    %p170 = scmp.eq.s32.totalorder %s13, 0
    %p171 = por %p169, %p170
    %p172 = scmp.ne.s32.totalorder %s164, %s166
    %p173 = scmp.eq.s32.totalorder %s18, 3
    %p174 = por %p172, %p173
    %p175 = scmp.ne.s32.totalorder %s166, %s167
    %p176 = scmp.eq.s32.totalorder %s18, 0
    %p177 = por %p175, %p176
    %p178 = scmp.ne.s32.totalorder %s166, %s167
    %p179 = scmp.eq.s32.totalorder %s19, 3
    %p180 = por %p178, %p179
    %p182 = scmp.ne.s32.totalorder %s167, %s181
    %p183 = scmp.eq.s32.totalorder %s19, 0
    %p184 = por %p182, %p183
    %s185 = ssub.s32 %s20, %s32
    %s186 = ssub.s32 %s21, %s28
    %s187 = sor.u32 %s185, %s186
    %p188 = scmp.eq.s32.totalorder %s187, 0
    %s190 = sadd.s32 %s189, 1
    %s191 = scalar_select %p188, %s189, %s190
    %p194 = pneg %p188
    %p195 = scmp.eq.s32.totalorder %s13, 3
    %p196 = por %p194, %p195
    %p197 = scmp.ne.s32.totalorder %s189, %s192
    %p198 = scmp.eq.s32.totalorder %s13, 0
    %p199 = por %p197, %p198
    %p200 = scmp.ne.s32.totalorder %s189, %s192
    %p201 = scmp.eq.s32.totalorder %s18, 3
    %p202 = por %p200, %p201
    %p203 = scmp.ne.s32.totalorder %s192, %s193
    %p204 = scmp.eq.s32.totalorder %s18, 0
    %p205 = por %p203, %p204
    %p206 = scmp.ne.s32.totalorder %s192, %s193
    %p207 = scmp.eq.s32.totalorder %s19, 3
    %p208 = por %p206, %p207
    %p210 = scmp.ne.s32.totalorder %s193, %s209
    %p211 = scmp.eq.s32.totalorder %s19, 0
    %p212 = por %p210, %p211
    %p213 = scmp.le.s32.totalorder 1, %s13
    %p214 = scmp.lt.s32.totalorder %s13, 5
    %p215 = pnand %p213, %p214
    %p216 = pneg %p215
    // Predicated region
    $region9: #{tpu_custom_call.1} parent=5 // pred_check
      _
    $region10: #{tpu_custom_call.1} parent=5 // pred_check_branch
      %218 = sbr.rel (%p215) target = $region12
    $region11: #{tpu_custom_call.1} parent=5 // pred_region
      %s219 = ssub.s32 %s13, 1
      // Predicated region
      $region13: #{tpu_custom_call.1} parent=11 // pred_check
        %p220 = pneg %p72
      $region14: #{tpu_custom_call.1} parent=11 // pred_check_branch
        %222 = sbr.rel (%p220) target = $region16
      $region15: #{tpu_custom_call.1} parent=11 // pred_region
        _
      $region16: #{tpu_custom_call.1} parent=11 // pred_fallthru
        _
      // Predicated region
      $region17: #{tpu_custom_call.1} parent=11 // pred_check
        %p223 = pneg %p93
      $region18: #{tpu_custom_call.1} parent=11 // pred_check_branch
        %225 = sbr.rel (%p223) target = $region20
      $region19: #{tpu_custom_call.1} parent=11 // pred_region
        _
      $region20: #{tpu_custom_call.1} parent=11 // pred_fallthru
        _
      // Predicated region
      $region21: #{tpu_custom_call.1} parent=11 // pred_check
        %p226 = pneg %p114
      $region22: #{tpu_custom_call.1} parent=11 // pred_check_branch
        %228 = sbr.rel (%p226) target = $region24
      $region23: #{tpu_custom_call.1} parent=11 // pred_region
        _
      $region24: #{tpu_custom_call.1} parent=11 // pred_fallthru
        _
      // Predicated region
      $region25: #{tpu_custom_call.1} parent=11 // pred_check
        %p229 = pneg %p135
      $region26: #{tpu_custom_call.1} parent=11 // pred_check_branch
        %231 = sbr.rel (%p229) target = $region28
      $region27: #{tpu_custom_call.1} parent=11 // pred_region
        _
      $region28: #{tpu_custom_call.1} parent=11 // pred_fallthru
        _
      // Predicated region
      $region29: #{tpu_custom_call.1} parent=11 // pred_check
        %p232 = pneg %p156
      $region30: #{tpu_custom_call.1} parent=11 // pred_check_branch
        %234 = sbr.rel (%p232) target = $region32
      $region31: #{tpu_custom_call.1} parent=11 // pred_region
        _
      $region32: #{tpu_custom_call.1} parent=11 // pred_fallthru
        _
      // Predicated region
      $region33: #{tpu_custom_call.1} parent=11 // pred_check
        %p235 = pneg %p177
      $region34: #{tpu_custom_call.1} parent=11 // pred_check_branch
        %237 = sbr.rel (%p235) target = $region36
      $region35: #{tpu_custom_call.1} parent=11 // pred_region
        _
      $region36: #{tpu_custom_call.1} parent=11 // pred_fallthru
        _
    $region12: #{tpu_custom_call.1} parent=5 // pred_fallthru
      _
    %p238 = scmp.lt.s32.totalorder %s13, 4
    // Predicated region
    $region37: #{tpu_custom_call.1} parent=5 // pred_check
      %p239 = pneg %p238
    $region38: #{tpu_custom_call.1} parent=5 // pred_check_branch
      %241 = sbr.rel (%p239) target = $region40
    $region39: #{tpu_custom_call.1} parent=5 // pred_region
      // Predicated region
      $region41: #{tpu_custom_call.1} parent=39 // pred_check
        %p242 = pneg %p45
      $region42: #{tpu_custom_call.1} parent=39 // pred_check_branch
        %244 = sbr.rel (%p242) target = $region44
      $region43: #{tpu_custom_call.1} parent=39 // pred_region
        %p245 = scmp.lt.s32.totalorder %s20, 1
        %s246 = scalar_select %p245, %s20, 1
        %s247 = smul.addr %s246, 8
        %s248 = smul.addr %s247, 8
        %s249 = scalar_lea.vmem %s0, %s248
      $region44: #{tpu_custom_call.1} parent=39 // pred_fallthru
        _
    $region40: #{tpu_custom_call.1} parent=5 // pred_fallthru
      _
    %p250 = scmp.le.s32.totalorder 1, %s13
    %p251 = scmp.lt.s32.totalorder %s13, 5
    %p252 = pnand %p250, %p251
    %p253 = pneg %p252
    // Predicated region
    $region45: #{tpu_custom_call.1} parent=5 // pred_check
      _
    $region46: #{tpu_custom_call.1} parent=5 // pred_check_branch
      %255 = sbr.rel (%p252) target = $region48
    $region47: #{tpu_custom_call.1} parent=5 // pred_region
      %s256 = ssub.s32 %s13, 1
      %p257 = scmp.lt.s32.totalorder %s22, 1
      %s258 = scalar_select %p257, %s22, 1
      %s259 = smul.addr %s258, 8
      %s260 = smul.addr %s259, 8
      %s261 = scalar_lea.vmem %s0, %s260
      %p262 = pneg %p51
      %p263 = pneg %p48
      %p264 = pneg %p72
      %p265 = pneg %p69
      %p266 = pneg %p93
      %p267 = pneg %p90
      %p268 = pneg %p114
      %p269 = pneg %p111
      %p270 = pneg %p135
      %p271 = pneg %p132
      %p272 = pneg %p156
      %p273 = pneg %p153
      %p274 = pneg %p177
      %p275 = pneg %p174
      %p276 = pneg %p205
      %p277 = pneg %p202
      %s278 = smul.u32 4, %s23
      %p279 = scmp.lt.s32.totalorder %s22, 1
      %s280 = scalar_select %p279, %s22, 1
      %p281 = scmp.lt.s32.totalorder %s278, 7
      %s282 = scalar_select %p281, %s278, 7
      %s283 = smul.addr %s280, 8
      %s284 = sadd.s32 %s282, %s283
      %s285 = smul.addr %s284, 8
      %s286 = scalar_lea.vmem %s7, %s285
      %p287 = scmp.lt.s32.totalorder %s22, 1
      %s288 = scalar_select %p287, %s22, 1
      %s289 = smul.addr %s288, 8
      %s290 = smul.addr %s289, 8
      %s291 = scalar_lea.vmem %s0, %s290
      %s292 = smul.u32 4, %s23
      %p293 = scmp.lt.s32.totalorder %s22, 1
      %s294 = scalar_select %p293, %s22, 1
      %p295 = scmp.lt.s32.totalorder %s292, 7
      %s296 = scalar_select %p295, %s292, 7
      %s297 = smul.addr %s294, 8
      %s298 = sadd.s32 %s296, %s297
      %s299 = smul.addr %s298, 8
      %s300 = scalar_lea.vmem %s7, %s299
      %s301 = smul.u32 4, %s23
      %p302 = scmp.eq.s32.totalorder %s23, 0
      // Predicated region
      $region49: #{tpu_custom_call.1} parent=47 // pred_check
        %p303 = pneg %p302
      $region50: #{tpu_custom_call.1} parent=47 // pred_check_branch
        %305 = sbr.rel (%p303) target = $region52
      $region51: #{tpu_custom_call.1} parent=47 // pred_region
        %v306 = vld [vmem:[%s291] sm:$0xff]
        %v307 = vld [vmem:[%s291 + $0x8] sm:$0xff]
        %v308 = vld [vmem:[%s291 + $0x10] sm:$0xff]
        %v309 = vld [vmem:[%s291 + $0x18] sm:$0xff]
        %v310 = vld [vmem:[%s291 + $0x20] sm:$0xff]
        %v311 = vld [vmem:[%s291 + $0x28] sm:$0xff]
        %v312 = vld [vmem:[%s291 + $0x30] sm:$0xff]
        %v313 = vld [vmem:[%s291 + $0x38] sm:$0xff]
        %v314 = vld [vmem:[%s3] sm:$0xff]
        %v315 = vld [vmem:[%s3 + $0x8] sm:$0xff]
        %v316 = vld [vmem:[%s3 + $0x10] sm:$0xff]
        %v317 = vld [vmem:[%s3 + $0x18] sm:$0xff]
        %v318 = vld [vmem:[%s4] sm:$0x1]
        %v320 = vperm.slane %v318, 0
        %vm322 = vcmask 261120
        %v324 = vsel %vm322, %v306, 0
        %v327 = vsel %vm322, %v307, 0
        %v330 = vsel %vm322, %v308, 0
        %v333 = vsel %vm322, %v309, 0
        %v336 = vsel %vm322, %v310, 0
        %v339 = vsel %vm322, %v311, 0
        %v342 = vsel %vm322, %v312, 0
        %v345 = vsel %vm322, %v313, 0
        %347 = vmatpush.msra.mxu0 0.0
        %348 = vmatpush.msra.mxu0 0.0
        %349 = vmatpush.msra.mxu0 0.0
        %350 = vmatpush.msra.mxu0 0.0
        %351 = vmatpush.msra.mxu0 0.0
        %352 = vmatpush.msra.mxu0 0.0
        %353 = vmatpush.msra.mxu0 0.0
        %354 = vmatpush.msra.mxu0 0.0
        %355 = vmatpush.msra.mxu0 0.0
        %356 = vmatpush.msra.mxu0 0.0
        %357 = vmatpush.msra.mxu0 0.0
        %358 = vmatpush.msra.mxu0 0.0
        %359 = vmatpush.msra.mxu0 %v317
        %360 = vmatpush.msra.mxu0 %v316
        %361 = vmatpush.msra.mxu0 %v315
        %362 = vmatpush.msra.mxu0 %v314
        %363 = vmatmul.f32.gmra.mxu0 %v324
        %v364 = vpop.f32.mrf.mxu0
        %v365 = vadd.f32 %v320, %v364
        %366 = vmatmul.f32.gmra.mxu0 %v327
        %v367 = vpop.f32.mrf.mxu0
        %v368 = vadd.f32 %v320, %v367
        %369 = vmatmul.f32.gmra.mxu0 %v330
        %v370 = vpop.f32.mrf.mxu0
        %v371 = vadd.f32 %v320, %v370
        %372 = vmatmul.f32.gmra.mxu0 %v333
        %v373 = vpop.f32.mrf.mxu0
        %v374 = vadd.f32 %v320, %v373
        %375 = vmatmul.f32.gmra.mxu0 %v336
        %v376 = vpop.f32.mrf.mxu0
        %v377 = vadd.f32 %v320, %v376
        %378 = vmatmul.f32.gmra.mxu0 %v339
        %v379 = vpop.f32.mrf.mxu0
        %v380 = vadd.f32 %v320, %v379
        %381 = vmatmul.f32.gmra.mxu0 %v342
        %v382 = vpop.f32.mrf.mxu0
        %v383 = vadd.f32 %v320, %v382
        %384 = vmatmul.f32.gmra.mxu0 %v345
        %v385 = vpop.f32.mrf.mxu0
        %v386 = vadd.f32 %v320, %v385
        %387 = vdwg.mxu0
        %388 = vst [vmem:[#allocation2] sm:$0xff] %v365
        %389 = vst [vmem:[#allocation2 + $0x8] sm:$0xff] %v368
        %390 = vst [vmem:[#allocation2 + $0x10] sm:$0xff] %v371
        %391 = vst [vmem:[#allocation2 + $0x18] sm:$0xff] %v374
        %392 = vst [vmem:[#allocation2 + $0x20] sm:$0xff] %v377
        %393 = vst [vmem:[#allocation2 + $0x28] sm:$0xff] %v380
        %394 = vst [vmem:[#allocation2 + $0x30] sm:$0xff] %v383
        %395 = vst [vmem:[#allocation2 + $0x38] sm:$0xff] %v386
        %v396 = vld [vmem:[%s5] sm:$0xff]
        %v397 = vld [vmem:[%s5 + $0x8] sm:$0xff]
        %v398 = vld [vmem:[%s5 + $0x10] sm:$0xff]
        %v399 = vld [vmem:[%s5 + $0x18] sm:$0xff]
        %v400 = vld [vmem:[%s6] sm:$0x1]
        %v402 = vperm.slane %v400, 0
        %404 = vmatpush.msra.mxu0 0.0
        %405 = vmatpush.msra.mxu0 0.0
        %406 = vmatpush.msra.mxu0 0.0
        %407 = vmatpush.msra.mxu0 0.0
        %408 = vmatpush.msra.mxu0 0.0
        %409 = vmatpush.msra.mxu0 0.0
        %410 = vmatpush.msra.mxu0 0.0
        %411 = vmatpush.msra.mxu0 0.0
        %412 = vmatpush.msra.mxu0 0.0
        %413 = vmatpush.msra.mxu0 0.0
        %414 = vmatpush.msra.mxu0 0.0
        %415 = vmatpush.msra.mxu0 0.0
        %416 = vmatpush.msra.mxu0 %v399
        %417 = vmatpush.msra.mxu0 %v398
        %418 = vmatpush.msra.mxu0 %v397
        %419 = vmatpush.msra.mxu0 %v396
        %420 = vmatmul.f32.gmra.mxu0 %v324
        %v421 = vpop.f32.mrf.mxu0
        %v422 = vadd.f32 %v402, %v421
        %423 = vmatmul.f32.gmra.mxu0 %v327
        %v424 = vpop.f32.mrf.mxu0
        %v425 = vadd.f32 %v402, %v424
        %426 = vmatmul.f32.gmra.mxu0 %v330
        %v427 = vpop.f32.mrf.mxu0
        %v428 = vadd.f32 %v402, %v427
        %429 = vmatmul.f32.gmra.mxu0 %v333
        %v430 = vpop.f32.mrf.mxu0
        %v431 = vadd.f32 %v402, %v430
        %432 = vmatmul.f32.gmra.mxu0 %v336
        %v433 = vpop.f32.mrf.mxu0
        %v434 = vadd.f32 %v402, %v433
        %435 = vmatmul.f32.gmra.mxu0 %v339
        %v436 = vpop.f32.mrf.mxu0
        %v437 = vadd.f32 %v402, %v436
        %438 = vmatmul.f32.gmra.mxu0 %v342
        %v439 = vpop.f32.mrf.mxu0
        %v440 = vadd.f32 %v402, %v439
        %441 = vmatmul.f32.gmra.mxu0 %v345
        %v442 = vpop.f32.mrf.mxu0
        %v443 = vadd.f32 %v402, %v442
        %444 = vdwg.mxu0
        %445 = vst.msk [vmem:[#allocation3] sm:$0xff] %vm322, %v422
        %446 = vst.msk [vmem:[#allocation3 + $0x8] sm:$0xff] %vm322, %v425
        %447 = vst.msk [vmem:[#allocation3 + $0x10] sm:$0xff] %vm322, %v428
        %448 = vst.msk [vmem:[#allocation3 + $0x18] sm:$0xff] %vm322, %v431
        %449 = vst.msk [vmem:[#allocation3 + $0x20] sm:$0xff] %vm322, %v434
        %450 = vst.msk [vmem:[#allocation3 + $0x28] sm:$0xff] %vm322, %v437
        %451 = vst.msk [vmem:[#allocation3 + $0x30] sm:$0xff] %vm322, %v440
        %452 = vst.msk [vmem:[#allocation3 + $0x38] sm:$0xff] %vm322, %v443
      $region52: #{tpu_custom_call.1} parent=47 // pred_fallthru
        _
      %s453 = smul.u32 %s23, 32
      %s454 = scalar_lea.vmem %s291, %s453
      %v455 = vld [vmem:[%s454] sm:$0xff]
      %v456 = vld [vmem:[%s454 + $0x8] sm:$0xff]
      %v457 = vld [vmem:[%s454 + $0x10] sm:$0xff]
      %v458 = vld [vmem:[%s454 + $0x18] sm:$0xff]
      %v459 = vld [vmem:[%s1] sm:$0xff]
      %v460 = vld [vmem:[%s1 + $0x8] sm:$0xff]
      %v461 = vld [vmem:[%s1 + $0x10] sm:$0xff]
      %v462 = vld [vmem:[%s1 + $0x18] sm:$0xff]
      %v463 = vld [vmem:[%s2] sm:$0x1]
      %v465 = vperm.slane %v463, 0
      %vm467 = vcmask 261120
      %v469 = vsel %vm467, %v455, 0
      %v472 = vsel %vm467, %v456, 0
      %v475 = vsel %vm467, %v457, 0
      %v478 = vsel %vm467, %v458, 0
      %480 = vmatpush.msra.mxu0 0.0
      %481 = vmatpush.msra.mxu0 0.0
      %482 = vmatpush.msra.mxu0 0.0
      %483 = vmatpush.msra.mxu0 0.0
      %484 = vmatpush.msra.mxu0 0.0
      %485 = vmatpush.msra.mxu0 0.0
      %486 = vmatpush.msra.mxu0 0.0
      %487 = vmatpush.msra.mxu0 0.0
      %488 = vmatpush.msra.mxu0 0.0
      %489 = vmatpush.msra.mxu0 0.0
      %490 = vmatpush.msra.mxu0 0.0
      %491 = vmatpush.msra.mxu0 0.0
      %492 = vmatpush.msra.mxu0 %v462
      %493 = vmatpush.msra.mxu0 %v461
      %494 = vmatpush.msra.mxu0 %v460
      %495 = vmatpush.msra.mxu0 %v459
      %496 = vmatmul.f32.gmra.mxu0 %v469
      %v497 = vpop.f32.mrf.mxu0
      %v498 = vadd.f32 %v465, %v497
      %499 = vmatmul.f32.gmra.mxu0 %v472
      %v500 = vpop.f32.mrf.mxu0
      %v501 = vadd.f32 %v465, %v500
      %502 = vmatmul.f32.gmra.mxu0 %v475
      %v503 = vpop.f32.mrf.mxu0
      %v504 = vadd.f32 %v465, %v503
      %505 = vmatmul.f32.gmra.mxu0 %v478
      %v506 = vpop.f32.mrf.mxu0
      %v507 = vadd.f32 %v465, %v506
      %508 = vdwg.mxu0
      %v509 = vld [vmem:[#allocation2] sm:$0xff]
      %v510 = vld [vmem:[#allocation2 + $0x8] sm:$0xff]
      %v511 = vld [vmem:[#allocation2 + $0x10] sm:$0xff]
      %v512 = vld [vmem:[#allocation2 + $0x18] sm:$0xff]
      %v513 = vld [vmem:[#allocation2 + $0x20] sm:$0xff]
      %v514 = vld [vmem:[#allocation2 + $0x28] sm:$0xff]
      %v515 = vld [vmem:[#allocation2 + $0x30] sm:$0xff]
      %v516 = vld [vmem:[#allocation2 + $0x38] sm:$0xff]
      %517 = vmatpush.xpose.msra.mxu0 0.0
      %518 = vmatpush.xpose.msra.mxu0 0.0
      %519 = vmatpush.xpose.msra.mxu0 0.0
      %520 = vmatpush.xpose.msra.mxu0 0.0
      %521 = vmatpush.xpose.msra.mxu0 0.0
      %522 = vmatpush.xpose.msra.mxu0 0.0
      %523 = vmatpush.xpose.msra.mxu0 0.0
      %524 = vmatpush.xpose.msra.mxu0 0.0
      %525 = vmatpush.xpose.msra.mxu0 %v516
      %526 = vmatpush.xpose.msra.mxu0 %v515
      %527 = vmatpush.xpose.msra.mxu0 %v514
      %528 = vmatpush.xpose.msra.mxu0 %v513
      %529 = vmatpush.xpose.msra.mxu0 %v512
      %530 = vmatpush.xpose.msra.mxu0 %v511
      %531 = vmatpush.xpose.msra.mxu0 %v510
      %532 = vmatpush.xpose.msra.mxu0 %v509
      %533 = vmatmul.f32.gmra.mxu0 %v498
      %v534 = vpop.f32.mrf.mxu0
      %v535 = vadd.f32 0.0, %v534
      %536 = vmatmul.f32.gmra.mxu0 %v501
      %v537 = vpop.f32.mrf.mxu0
      %v538 = vadd.f32 0.0, %v537
      %539 = vmatmul.f32.gmra.mxu0 %v504
      %v540 = vpop.f32.mrf.mxu0
      %v541 = vadd.f32 0.0, %v540
      %542 = vmatmul.f32.gmra.mxu0 %v507
      %v543 = vpop.f32.mrf.mxu0
      %v544 = vadd.f32 0.0, %v543
      %545 = vdwg.mxu0
      %vm546 = vcmask 523264
      %v547 = vsel %vm546, %v535, -inf
      %548 = vmax.xlane.f32.xlu0 %v547
      %v549 = vpop.xlane.xlu0 %548
      %v550 = vsel %vm546, %v538, -inf
      %551 = vmax.xlane.f32.xlu0 %v550
      %v552 = vpop.xlane.xlu0 %551
      %v553 = vsel %vm546, %v541, -inf
      %554 = vmax.xlane.f32.xlu0 %v553
      %v555 = vpop.xlane.xlu0 %554
      %v556 = vsel %vm546, %v544, -inf
      %557 = vmax.xlane.f32.xlu0 %v556
      %v558 = vpop.xlane.xlu0 %557
      %v559 = vsub.f32 %v535, %v549
      %v560 = vsub.f32 %v538, %v552
      %v561 = vsub.f32 %v541, %v555
      %v562 = vsub.f32 %v544, %v558
      %v563 = vmul.f32 %v559, 1.442695
      %v564 = vpow.pop %v563
      %v565 = vmul.f32 %v560, 1.442695
      %v566 = vpow.pop %v565
      %v567 = vmul.f32 %v561, 1.442695
      %v568 = vpow.pop %v567
      %v569 = vmul.f32 %v562, 1.442695
      %v570 = vpow.pop %v569
      %v571 = vsel %vm546, %v564, 0.0
      %572 = vadd.xlane.f32.xlu0 %v571
      %v573 = vpop.xlane.xlu0 %572
      %v574 = vsel %vm546, %v566, 0.0
      %575 = vadd.xlane.f32.xlu0 %v574
      %v576 = vpop.xlane.xlu0 %575
      %v577 = vsel %vm546, %v568, 0.0
      %578 = vadd.xlane.f32.xlu0 %v577
      %v579 = vpop.xlane.xlu0 %578
      %v580 = vsel %vm546, %v570, 0.0
      %581 = vadd.xlane.f32.xlu0 %v580
      %v582 = vpop.xlane.xlu0 %581
      %v583 = vld [vmem:[#allocation3] sm:$0xff]
      %v584 = vld [vmem:[#allocation3 + $0x8] sm:$0xff]
      %v585 = vld [vmem:[#allocation3 + $0x10] sm:$0xff]
      %v586 = vld [vmem:[#allocation3 + $0x18] sm:$0xff]
      %v587 = vld [vmem:[#allocation3 + $0x20] sm:$0xff]
      %v588 = vld [vmem:[#allocation3 + $0x28] sm:$0xff]
      %v589 = vld [vmem:[#allocation3 + $0x30] sm:$0xff]
      %v590 = vld [vmem:[#allocation3 + $0x38] sm:$0xff]
      %v592 = vsel %vm546, %v564, 0
      %v595 = vsel %vm546, %v566, 0
      %v598 = vsel %vm546, %v568, 0
      %v601 = vsel %vm546, %v570, 0
      %603 = vmatpush.msra.mxu0 0.0
      %604 = vmatpush.msra.mxu0 0.0
      %605 = vmatpush.msra.mxu0 0.0
      %606 = vmatpush.msra.mxu0 0.0
      %607 = vmatpush.msra.mxu0 0.0
      %608 = vmatpush.msra.mxu0 0.0
      %609 = vmatpush.msra.mxu0 0.0
      %610 = vmatpush.msra.mxu0 0.0
      %611 = vmatpush.msra.mxu0 %v590
      %612 = vmatpush.msra.mxu0 %v589
      %613 = vmatpush.msra.mxu0 %v588
      %614 = vmatpush.msra.mxu0 %v587
      %615 = vmatpush.msra.mxu0 %v586
      %616 = vmatpush.msra.mxu0 %v585
      %617 = vmatpush.msra.mxu0 %v584
      %618 = vmatpush.msra.mxu0 %v583
      %619 = vmatmul.f32.gmra.mxu0 %v592
      %v620 = vpop.f32.mrf.mxu0
      %v621 = vadd.f32 0.0, %v620
      %622 = vmatmul.f32.gmra.mxu0 %v595
      %v623 = vpop.f32.mrf.mxu0
      %v624 = vadd.f32 0.0, %v623
      %625 = vmatmul.f32.gmra.mxu0 %v598
      %v626 = vpop.f32.mrf.mxu0
      %v627 = vadd.f32 0.0, %v626
      %628 = vmatmul.f32.gmra.mxu0 %v601
      %v629 = vpop.f32.mrf.mxu0
      %v630 = vadd.f32 0.0, %v629
      %631 = vdwg.mxu0
      %v632 = vrcp.pop %v573
      %v633 = vmul.f32 %v573, %v632
      %v634 = vsub.f32 1.0, %v633
      %v635 = vmul.f32 %v632, %v634
      %v636 = vadd.f32 %v632, %v635
      %vm637 = vweird.f32 %v573
      %vm638 = vweird.f32 %v632
      %vm639 = vmor %vm637, %vm638
      %v640 = vsel %vm639, %v632, %v636
      %v641 = vand.u32 2147483647, %v573
      %vm642 = vcmp.eq.f32.partialorder %v641, 8.507059e+37
      %v643 = vand.u32 %v573, 2147483648
      %v644 = vor.u32 1.1754944e-38, %v643
      %v645 = vsel %vm642, %v644, %v640
      %v646 = vmul.f32 1.0, %v645
      %v647 = vrcp.pop %v576
      %v648 = vmul.f32 %v576, %v647
      %v649 = vsub.f32 1.0, %v648
      %v650 = vmul.f32 %v647, %v649
      %v651 = vadd.f32 %v647, %v650
      %vm652 = vweird.f32 %v576
      %vm653 = vweird.f32 %v647
      %vm654 = vmor %vm652, %vm653
      %v655 = vsel %vm654, %v647, %v651
      %v656 = vand.u32 2147483647, %v576
      %vm657 = vcmp.eq.f32.partialorder %v656, 8.507059e+37
      %v658 = vand.u32 %v576, 2147483648
      %v659 = vor.u32 1.1754944e-38, %v658
      %v660 = vsel %vm657, %v659, %v655
      %v661 = vmul.f32 1.0, %v660
      %v662 = vrcp.pop %v579
      %v663 = vmul.f32 %v579, %v662
      %v664 = vsub.f32 1.0, %v663
      %v665 = vmul.f32 %v662, %v664
      %v666 = vadd.f32 %v662, %v665
      %vm667 = vweird.f32 %v579
      %vm668 = vweird.f32 %v662
      %vm669 = vmor %vm667, %vm668
      %v670 = vsel %vm669, %v662, %v666
      %v671 = vand.u32 2147483647, %v579
      %vm672 = vcmp.eq.f32.partialorder %v671, 8.507059e+37
      %v673 = vand.u32 %v579, 2147483648
      %v674 = vor.u32 1.1754944e-38, %v673
      %v675 = vsel %vm672, %v674, %v670
      %v676 = vmul.f32 1.0, %v675
      %v677 = vrcp.pop %v582
      %v678 = vmul.f32 %v582, %v677
      %v679 = vsub.f32 1.0, %v678
      %v680 = vmul.f32 %v677, %v679
      %v681 = vadd.f32 %v677, %v680
      %vm682 = vweird.f32 %v582
      %vm683 = vweird.f32 %v677
      %vm684 = vmor %vm682, %vm683
      %v685 = vsel %vm684, %v677, %v681
      %v686 = vand.u32 2147483647, %v582
      %vm687 = vcmp.eq.f32.partialorder %v686, 8.507059e+37
      %v688 = vand.u32 %v582, 2147483648
      %v689 = vor.u32 1.1754944e-38, %v688
      %v690 = vsel %vm687, %v689, %v685
      %v691 = vmul.f32 1.0, %v690
      %v692 = vmul.f32 %v621, %v646
      %v693 = vmul.f32 %v624, %v661
      %v694 = vmul.f32 %v627, %v676
      %v695 = vmul.f32 %v630, %v691
      %v696 = vadd.f32 %v692, %v455
      %v697 = vadd.f32 %v693, %v456
      %v698 = vadd.f32 %v694, %v457
      %v699 = vadd.f32 %v695, %v458
      %700 = vst.msk [vmem:[%s300] sm:$0xff] %vm467, %v696
      %701 = vst.msk [vmem:[%s300 + $0x8] sm:$0xff] %vm467, %v697
      %702 = vst.msk [vmem:[%s300 + $0x10] sm:$0xff] %vm467, %v698
      %703 = vst.msk [vmem:[%s300 + $0x18] sm:$0xff] %vm467, %v699
      %s704 = smul.u32 4, %s23
      %p705 = scmp.lt.s32.totalorder %s22, 1
      %s706 = scalar_select %p705, %s22, 1
      %p707 = scmp.lt.s32.totalorder %s704, 7
      %s708 = scalar_select %p707, %s704, 7
      %s709 = smul.addr %s706, 8
      %s710 = sadd.s32 %s708, %s709
      %s711 = smul.addr %s710, 8
      %s712 = scalar_lea.vmem %s7, %s711
      // Predicated region
      $region53: #{tpu_custom_call.1} parent=47 // pred_check
        %p713 = pneg %p202
      $region54: #{tpu_custom_call.1} parent=47 // pred_check_branch
        %715 = sbr.rel (%p713) target = $region56
      $region55: #{tpu_custom_call.1} parent=47 // pred_region
        %s716 = smul.u32 4, %s23
      $region56: #{tpu_custom_call.1} parent=47 // pred_fallthru
        _
    $region48: #{tpu_custom_call.1} parent=5 // pred_fallthru
      _
    %p717 = scmp.le.s32.totalorder 2, %s13
    // Predicated region
    $region57: #{tpu_custom_call.1} parent=5 // pred_check
      %p718 = pneg %p717
    $region58: #{tpu_custom_call.1} parent=5 // pred_check_branch
      %720 = sbr.rel (%p718) target = $region60
    $region59: #{tpu_custom_call.1} parent=5 // pred_region
      %s721 = ssub.s32 %s13, 2
      // Predicated region
      $region61: #{tpu_custom_call.1} parent=59 // pred_check
        %p722 = pneg %p208
      $region62: #{tpu_custom_call.1} parent=59 // pred_check_branch
        %724 = sbr.rel (%p722) target = $region64
      $region63: #{tpu_custom_call.1} parent=59 // pred_region
        %s725 = smul.u32 4, %s25
        %p726 = scmp.lt.s32.totalorder %s24, 1
        %s727 = scalar_select %p726, %s24, 1
        %p728 = scmp.lt.s32.totalorder %s725, 7
        %s729 = scalar_select %p728, %s725, 7
        %s730 = smul.addr %s727, 8
        %s731 = sadd.s32 %s729, %s730
        %s732 = smul.addr %s731, 8
        %s733 = scalar_lea.vmem %s7, %s732
      $region64: #{tpu_custom_call.1} parent=59 // pred_fallthru
        _
    $region60: #{tpu_custom_call.1} parent=5 // pred_fallthru
      _
  $region6: #{tpu_custom_call.1} parent=0 // loop_footer
    %s17 = sadd.s32 1, %s13
  $region7: #{tpu_custom_call.1} parent=0 // loop_footer_branch
    %12 = sbr.rel target = $region3
  $region8: #{tpu_custom_call.1} parent=0 // loop_exit
    _

</llo_original>
